<compile_context>
chip_gen: v7x
topology: tpu7x:2x2x1
jax: 0.10.0
libtpu: 0.0.40
codegen_flags: <defaults>
</compile_context>

<pallas_src>
import jax
import jax.numpy as jnp
from jax import lax
from jax.experimental import pallas as pl
from jax.experimental.pallas import tpu as pltpu


def _concater_kernel(x_ref, w_ref, b_ref, o_ref):
    # x_ref : (tm, H)    input row-tile
    # w_ref : (H, H)     linear weight, torch layout (out_features, in_features)
    # b_ref : (1, H)     linear bias
    # o_ref : (tm, 2H)   output tile = [x | x @ W.T + b]
    H = x_ref.shape[1]
    x = x_ref[...]
    # x @ W.T without materializing a transposed copy of W (contraction on
    # W's second axis); f32 accumulation on the MXU.
    y = lax.dot_general(
        x,
        w_ref[...],
        dimension_numbers=(((1,), (1,)), ((), ())),
        preferred_element_type=jnp.float32,
    )
    y = (y + b_ref[...]).astype(o_ref.dtype)

    if H % 128 == 0:
        # Lane-aligned: two direct slab stores, no concat temporary.
        o_ref[:, :H] = x
        o_ref[:, H:] = y
    else:
        # Small / unaligned hidden dim: single full-tile store.
        o_ref[...] = jnp.concatenate([x, y], axis=-1)


def _round_up(n, m):
    return ((n + m - 1) // m) * m


def _choose_tm(M, H, itemsize, *, budget_bytes=24 * 1024 * 1024, tm_max=1024):
    """Pick the largest 8-aligned row tile whose double-buffered working set
    (x tile + out tile + weight + bias) fits the VMEM budget (safe for the
    64 MiB-VMEM v7x as well as v5e/v6e)."""
    fixed = 2 * (H * H + H) * itemsize          # weight + bias (double-buffered)
    per_row = 2 * (H + 2 * H) * itemsize        # x tile + out tile (double-buffered)
    avail = max(budget_bytes - fixed, per_row * 8)
    tm = min(tm_max, avail // per_row)
    tm = max(8, (tm // 8) * 8)
    tm = min(tm, _round_up(M, 8))               # don't over-tile tiny inputs
    return int(tm)


def concater_linear(x, weight, bias, *, tm=None):
    """
    x      : (B, S, H) float32
    weight : (H, H)   torch convention (out_features, in_features)
    bias   : (H,)
    returns (B, S, 2*H) = concat([x, x @ weight.T + bias], axis=-1)
    """
    B, S, H = x.shape
    M = B * S
    itemsize = jnp.dtype(x.dtype).itemsize

    if tm is None:
        tm = _choose_tm(M, H, itemsize)
    tm = max(8, min(tm, _round_up(M, 8)))
    M_pad = _round_up(M, tm)

    x2 = x.reshape(M, H)
    if M_pad != M:
        x2 = jnp.pad(x2, ((0, M_pad - M), (0, 0)))
    b2 = bias.reshape(1, H)

    # TODO(synk): for H beyond ~1-2K the (H, H) weight should be tiled along a
    # second (N, and optionally K) grid axis instead of loaded whole per step.

    cost = pl.CostEstimate(
        flops=2 * M_pad * H * H,
        transcendentals=0,
        bytes_accessed=itemsize * (M_pad * H + H * H + H + M_pad * 2 * H),
    )

    out = pl.pallas_call(
        _concater_kernel,
        out_shape=jax.ShapeDtypeStruct((M_pad, 2 * H), x.dtype),
        grid_spec=pltpu.PrefetchScalarGridSpec(
            num_scalar_prefetch=0,
            grid=(M_pad // tm,),
            in_specs=[
                pl.BlockSpec((tm, H), lambda i: (i, 0)),   # x row-tile
                pl.BlockSpec((H, H), lambda i: (0, 0)),    # full weight (constant)
                pl.BlockSpec((1, H), lambda i: (0, 0)),    # bias (constant)
            ],
            out_specs=pl.BlockSpec((tm, 2 * H), lambda i: (i, 0)),
        ),
        compiler_params=pltpu.CompilerParams(
            dimension_semantics=("parallel",),
        ),
        cost_estimate=cost,
    )(x2, weight, b2)

    if M_pad != M:
        out = out[:M]
    return out.reshape(B, S, 2 * H)


def _reference(x, weight, bias):
    y = jnp.einsum("bsh,oh->bso", x, weight) + bias
    return jnp.concatenate([x, y], axis=-1)


def _run_case(key, B, S, H):
    kx, kw, kb = jax.random.split(key, 3)
    x = jax.random.normal(kx, (B, S, H), dtype=jnp.float32)
    # Deterministic nn.Linear-style init: U(-1/sqrt(H), 1/sqrt(H))
    bound = 1.0 / (H ** 0.5)
    weight = jax.random.uniform(kw, (H, H), jnp.float32, -bound, bound)
    bias = jax.random.uniform(kb, (H,), jnp.float32, -bound, bound)

    out = jax.block_until_ready(concater_linear(x, weight, bias))
    ref = _reference(x, weight, bias)
    assert out.shape == (B, S, 2 * H)
    assert jnp.allclose(out, ref, atol=1e-5, rtol=1e-5)


if __name__ == "__main__":
    key = jax.random.PRNGKey(0)
    k1, k2 = jax.random.split(key)

    # Small / unaligned hidden dim (concatenate path).
    _run_case(k1, B=2, S=8, H=32)
    # Lane-aligned hidden dim (direct slab-store path).
    _run_case(k2, B=2, S=8, H=128)

    print("KERNEL_OK")
</pallas_src>

<mosaic_0001>
module attributes {stable_mosaic.version = 11 : i64} {
  func.func @_concater_kernel(%arg0: i32, %arg1: memref<16x32xf32, #tpu.memory_space<vmem>>, %arg2: memref<32x32xf32, #tpu.memory_space<vmem>>, %arg3: memref<1x32xf32, #tpu.memory_space<vmem>>, %arg4: memref<16x64xf32, #tpu.memory_space<vmem>>) attributes {dimension_semantics = [#tpu.dimension_semantics<parallel>], iteration_bounds = array<i64: 1>, scalar_prefetch = 0 : i64, scratch_operands = 0 : i64, tpu.core_type = #tpu.core_type<tc>, window_params = [{transform_indices = @transform_0, window_bounds = array<i64: 16, 32>}, {pipeline_mode = #tpu.pipeline_mode<synchronous>, transform_indices = @transform_1, window_bounds = array<i64: 32, 32>}, {pipeline_mode = #tpu.pipeline_mode<synchronous>, transform_indices = @transform_2, window_bounds = array<i64: 1, 32>}, {transform_indices = @transform_3, window_bounds = array<i64: 16, 64>}]} {
    %c0 = arith.constant 0 : index
    %c0_0 = arith.constant 0 : index
    %0 = vector.load %arg1[%c0, %c0_0] : memref<16x32xf32, #tpu.memory_space<vmem>>, vector<16x32xf32>
    %c0_1 = arith.constant 0 : index
    %c0_2 = arith.constant 0 : index
    %1 = vector.load %arg2[%c0_1, %c0_2] : memref<32x32xf32, #tpu.memory_space<vmem>>, vector<32x32xf32>
    %cst = arith.constant dense<0.000000e+00> : vector<16x32xf32>
    %2 = tpu.matmul %0, %1, %cst {dimension_numbers = #tpu.dot_dimension_numbers<[1], [1], [0], [0], [0, 0, 1, 0], [], []>} : vector<16x32xf32>, vector<32x32xf32>, vector<16x32xf32> -> vector<16x32xf32>
    %c0_3 = arith.constant 0 : index
    %c0_4 = arith.constant 0 : index
    %3 = vector.load %arg3[%c0_3, %c0_4] : memref<1x32xf32, #tpu.memory_space<vmem>>, vector<1x32xf32>
    %4 = vector.broadcast %3 : vector<1x32xf32> to vector<16x32xf32>
    %5 = arith.addf %2, %4 : vector<16x32xf32>
    %6 = tpu.concatenate %0, %5 in 1 : vector<16x32xf32>, vector<16x32xf32> -> vector<16x64xf32>
    %c0_5 = arith.constant 0 : index
    %c0_6 = arith.constant 0 : index
    %7 = vector.load %arg4[%c0_5, %c0_6] : memref<16x64xf32, #tpu.memory_space<vmem>>, vector<16x64xf32>
    tpu.vector_store %arg4[%c0_5, %c0_6], %6 {strides = array<i32>} : memref<16x64xf32, #tpu.memory_space<vmem>>, vector<16x64xf32>,
    return
  }
  func.func @transform_0(%arg0: i32) -> (i32, i32) {
    %c0_i32 = arith.constant 0 : i32
    %c0_i32_0 = arith.constant 0 : i32
    return %arg0, %c0_i32 : i32, i32
  }
  func.func @transform_1(%arg0: i32) -> (i32, i32) {
    %c0_i32 = arith.constant 0 : i32
    %c0_i32_0 = arith.constant 0 : i32
    %c0_i32_1 = arith.constant 0 : i32
    return %c0_i32, %c0_i32_0 : i32, i32
  }
  func.func @transform_2(%arg0: i32) -> (i32, i32) {
    %c0_i32 = arith.constant 0 : i32
    %c0_i32_0 = arith.constant 0 : i32
    %c0_i32_1 = arith.constant 0 : i32
    return %c0_i32, %c0_i32_0 : i32, i32
  }
  func.func @transform_3(%arg0: i32) -> (i32, i32) {
    %c0_i32 = arith.constant 0 : i32
    %c0_i32_0 = arith.constant 0 : i32
    return %arg0, %c0_i32 : i32, i32
  }
}

</mosaic_0001>

<llo_original>
// kernel: tpu_custom_call.1
$region0: #{tpu_custom_call.1}
  #allocation0 [shape = 'u32[]', space=smem, size = 0x4, offset = 0x4, fixed_abs, tag = 'smem constant byte address 0x4 - core index']
  #allocation1 [shape = 'u32[144,128]{1,0:T(1,128)}', space=vmem, size = 0x12000, scoped, tag = 'internal scratch']
  %s0 = inlined_call_operand.hbm [shape: f32[16,32], index: 0, kind: input, shape index: {}]
  %s1 = inlined_call_operand.hbm [shape: f32[32,32], index: 1, kind: input, shape index: {}]
  %s2 = inlined_call_operand.vmem [shape: f32[1,32], index: 2, kind: input, shape index: {}]
  %s3 = inlined_call_operand.hbm [shape: f32[16,64], index: 3, kind: output, shape index: {}]
  %s4 = sld [smem:[#allocation0]]
  $region30: #{tpu_custom_call.1} parent=0
    _
  %s6 = ssub.s32 1, %s4
  %s7 = scalar_select 0, %s6, %s4
  $region1: #{tpu_custom_call.1} parent=0
    #allocation2 [shape = 'u8[8192]{0}', space=vmem, size = 0x2000, scoped, tag = 'input window, operand 0, single buffered']
    #allocation3 [shape = 's32[1]{0}', space=sflag, size = 0x4, scoped, tag = 'scoped memory for tpu_custom_call.1']
    #allocation4 [shape = 's32[1]{0}', space=sflag, size = 0x4, scoped, tag = 'scoped memory for tpu_custom_call.1']
    #allocation5 [shape = 'u8[16384]{0}', space=vmem, size = 0x4000, scoped, tag = 'input window, operand 1, single buffered']
    #allocation6 [shape = 's32[1]{0}', space=sflag, size = 0x4, scoped, tag = 'scoped memory for tpu_custom_call.1']
    #allocation7 [shape = 'u8[8192]{0}', space=vmem, size = 0x2000, scoped, tag = 'output window, operand 0, single buffered']
    %8 = vsyncpa [#allocation3], 0
    %9 = vsyncpa [#allocation6], 0
    %10 = vsyncpa [#allocation4], 0
    // Predicated region
    $region2: #{tpu_custom_call.1} parent=1 // pred_check
      _
    $region3: #{tpu_custom_call.1} parent=1 // pred_check_branch
      %12 = sbr.rel (0) target = $region5
    $region4: #{tpu_custom_call.1} parent=1 // pred_region
      %s14 = ssub.s32 256, 256
      %15 = vsyncadd [#allocation3], %s14
      %s16 = sshll.u32 [#allocation2], 4
      %s17 = int_to_ptr.vmem [resolvable:$true] %s16
      %22 = dma.hbm_to_vmem [thread:$0]  %s0, 256, %s17, [#allocation3], 128, 128, 8
    $region5: #{tpu_custom_call.1} parent=1 // pred_fallthru
      _
    // Predicated region
    $region6: #{tpu_custom_call.1} parent=1 // pred_check
      _
    $region7: #{tpu_custom_call.1} parent=1 // pred_check_branch
      %24 = sbr.rel (0) target = $region9
    $region8: #{tpu_custom_call.1} parent=1 // pred_region
      %s26 = ssub.s32 512, 512
      %27 = vsyncadd [#allocation6], %s26
      %s28 = sshll.u32 [#allocation5], 4
      %s29 = int_to_ptr.vmem [resolvable:$true] %s28
      %34 = dma.hbm_to_vmem [thread:$0]  %s1, 512, %s29, [#allocation6], 128, 128, 8
    $region9: #{tpu_custom_call.1} parent=1 // pred_fallthru
      _
    // Predicated region
    $region10: #{tpu_custom_call.1} parent=1 // pred_check
      _
    $region11: #{tpu_custom_call.1} parent=1 // pred_check_branch
      %36 = sbr.rel (0) target = $region13
    $region12: #{tpu_custom_call.1} parent=1 // pred_region
      _
    $region13: #{tpu_custom_call.1} parent=1 // pred_fallthru
      _
    // Predicated region
    $region14: #{tpu_custom_call.1} parent=1 // pred_check
      _
    $region15: #{tpu_custom_call.1} parent=1 // pred_check_branch
      %38 = sbr.rel (0) target = $region17
    $region16: #{tpu_custom_call.1} parent=1 // pred_region
      %39 = dma.done [#allocation3], 256
    $region17: #{tpu_custom_call.1} parent=1 // pred_fallthru
      _
    // Predicated region
    $region18: #{tpu_custom_call.1} parent=1 // pred_check
      _
    $region19: #{tpu_custom_call.1} parent=1 // pred_check_branch
      %41 = sbr.rel (0) target = $region21
    $region20: #{tpu_custom_call.1} parent=1 // pred_region
      %42 = dma.done [#allocation6], 512
    $region21: #{tpu_custom_call.1} parent=1 // pred_fallthru
      _
    %v43 = vld [vmem:[#allocation2] sm:$0xff]
    %v44 = vld [vmem:[#allocation2 + $0x8] sm:$0xff]
    %v45 = vld [vmem:[#allocation5] sm:$0xff]
    %v46 = vld [vmem:[#allocation5 + $0x8] sm:$0xff]
    %v47 = vld [vmem:[#allocation5 + $0x10] sm:$0xff]
    %v48 = vld [vmem:[#allocation5 + $0x18] sm:$0xff]
    %v49 = vld [vmem:[%s2] sm:$0x1]
    %v51 = vlaneseq
    %v52 = vshrl.u32 %v51, 7
    %v53 = vsub.s32 0, %v52
    %v54 = vrot.slane %v49, %v53
    %vm56 = vcmask 261120
    %v58 = vsel %vm56, %v43, 0
    %v61 = vsel %vm56, %v44, 0
    %v64 = vsel %vm56, %v45, 0
    %v67 = vsel %vm56, %v46, 0
    %v70 = vsel %vm56, %v47, 0
    %v73 = vsel %vm56, %v48, 0
    %75 = vmatprep.subr.mxu0 0.0
    %76 = vmatpush1.xpose.msra.mxu0 %v64
    %77 = vmatprep.subr.mxu0 0.0
    %78 = vmatpush1.xpose.msra.mxu0 %v67
    %79 = vmatprep.subr.mxu0 0.0
    %80 = vmatpush1.xpose.msra.mxu0 %v70
    %81 = vmatprep.subr.mxu0 0.0
    %82 = vmatpush1.xpose.msra.mxu0 %v73
    %83 = vmatprep.subr.mxu0 0.0
    %84 = vmatpush1.xpose.msra.mxu0 0.0
    %85 = vmatprep.subr.mxu0 0.0
    %86 = vmatpush1.xpose.msra.mxu0 0.0
    %87 = vmatprep.subr.mxu0 0.0
    %88 = vmatpush1.xpose.msra.mxu0 0.0
    %89 = vmatprep.subr.mxu0 0.0
    %90 = vmatpush1.xpose.msra.mxu0 0.0
    %91 = vmatprep.subr.mxu0 0.0
    %92 = vmatpush1.xpose.msra.mxu0 0.0
    %93 = vmatprep.subr.mxu0 0.0
    %94 = vmatpush1.xpose.msra.mxu0 0.0
    %95 = vmatprep.subr.mxu0 0.0
    %96 = vmatpush1.xpose.msra.mxu0 0.0
    %97 = vmatprep.subr.mxu0 0.0
    %98 = vmatpush1.xpose.msra.mxu0 0.0
    %99 = vmatprep.subr.mxu0 0.0
    %100 = vmatpush1.xpose.msra.mxu0 0.0
    %101 = vmatprep.subr.mxu0 0.0
    %102 = vmatpush1.xpose.msra.mxu0 0.0
    %103 = vmatprep.subr.mxu0 0.0
    %104 = vmatpush1.xpose.msra.mxu0 0.0
    %105 = vmatprep.subr.mxu0 0.0
    %106 = vmatpush1.xpose.msra.mxu0 0.0
    %107 = vmatprep.subr.mxu0 0.0
    %108 = vmatpush1.xpose.msra.mxu0 0.0
    %109 = vmatprep.subr.mxu0 0.0
    %110 = vmatpush1.xpose.msra.mxu0 0.0
    %111 = vmatprep.subr.mxu0 0.0
    %112 = vmatpush1.xpose.msra.mxu0 0.0
    %113 = vmatprep.subr.mxu0 0.0
    %114 = vmatpush1.xpose.msra.mxu0 0.0
    %115 = vmatprep.subr.mxu0 0.0
    %116 = vmatpush1.xpose.msra.mxu0 0.0
    %117 = vmatprep.subr.mxu0 0.0
    %118 = vmatpush1.xpose.msra.mxu0 0.0
    %119 = vmatprep.subr.mxu0 0.0
    %120 = vmatpush1.xpose.msra.mxu0 0.0
    %121 = vmatprep.subr.mxu0 0.0
    %122 = vmatpush1.xpose.msra.mxu0 0.0
    %123 = vmatprep.subr.mxu0 0.0
    %124 = vmatpush1.xpose.msra.mxu0 0.0
    %125 = vmatprep.subr.mxu0 0.0
    %126 = vmatpush1.xpose.msra.mxu0 0.0
    %127 = vmatprep.subr.mxu0 0.0
    %128 = vmatpush1.xpose.msra.mxu0 0.0
    %129 = vmatprep.subr.mxu0 0.0
    %130 = vmatpush1.xpose.msra.mxu0 0.0
    %131 = vmatprep.subr.mxu0 0.0
    %132 = vmatpush1.xpose.msra.mxu0 0.0
    %133 = vmatprep.subr.mxu0 0.0
    %134 = vmatpush1.xpose.msra.mxu0 0.0
    %135 = vmatprep.subr.mxu0 0.0
    %136 = vmatpush1.xpose.msra.mxu0 0.0
    %137 = vmatprep.subr.mxu0 0.0
    %138 = vmatpush1.xpose.msra.mxu0 0.0
    %139 = vmatprep.mubr.f32.mxu0 0.0
    %140 = vmatmul.mubr.f32.gmra.mrb[0].mxu0 %v58
    %v141 = vpop.f32.mrb[0].mxu0
    %v142 = vadd.f32 %v54, %v141
    %v143 = vpop.f32.mrb[0].mxu0
    %144 = vmatprep.mubr.f32.mxu0 0.0
    %145 = vmatmul.mubr.f32.gmra.mrb[0].mxu0 %v61
    %v146 = vpop.f32.mrb[0].mxu0
    %v147 = vadd.f32 %v54, %v146
    %v148 = vpop.f32.mrb[0].mxu0
    %149 = vdwg.mxu0
    %152 = vrot.lane.b32.xlu0 %v142, 32
    %v153 = vpop.permute.xlu0 %152
    %154 = vrot.lane.b32.xlu0 %v147, 32
    %v155 = vpop.permute.xlu0 %154
    %v158 = vsel %vm56, %v43, %v153
    %v159 = vsel %vm56, %v44, %v155
    %vm160 = vcmask 523264
    %161 = vst.msk [vmem:[#allocation7] sm:$0xff] %vm160, %v158
    %162 = vst.msk [vmem:[#allocation7 + $0x8] sm:$0xff] %vm160, %v159
    // Predicated region
    $region22: #{tpu_custom_call.1} parent=1 // pred_check
      _
    $region23: #{tpu_custom_call.1} parent=1 // pred_check_branch
      %164 = sbr.rel (0) target = $region25
    $region24: #{tpu_custom_call.1} parent=1 // pred_region
      %s166 = ssub.s32 256, 256
      %167 = vsyncadd [#allocation4], %s166
      %s168 = sshll.u32 [#allocation7], 4
      %s169 = int_to_ptr.vmem [resolvable:$true] %s168
      %174 = dma.vmem_to_hbm [thread:$0]  %s169, 256, %s3, [#allocation4], 128, 128, 8
    $region25: #{tpu_custom_call.1} parent=1 // pred_fallthru
      _
    // Predicated region
    $region26: #{tpu_custom_call.1} parent=1 // pred_check
      _
    $region27: #{tpu_custom_call.1} parent=1 // pred_check_branch
      %176 = sbr.rel (0) target = $region29
    $region28: #{tpu_custom_call.1} parent=1 // pred_region
      %177 = dma.done [#allocation4], 256
    $region29: #{tpu_custom_call.1} parent=1 // pred_fallthru
      _
    %178 = vsyncpa [#allocation3], 1
    %179 = vsyncpa [#allocation6], 1
    %180 = vsyncpa [#allocation4], 1

</llo_original>
